<compile_context>
chip_gen: v6e
topology: v6e:2x2x1
jax: 0.10.0
libtpu: 0.0.40
codegen_flags: <defaults>
</compile_context>

<pallas_src>
import functools

import jax
import jax.numpy as jnp
from jax.experimental import pallas as pl
from jax.experimental.pallas import tpu as pltpu

_LANES = 128        # lane width of the packed slabs / outputs
_MAX_BLOCK_B = 256  # batch rows per grid step


def _round_up(n, m):
    return (n + m - 1) // m * m


def _actor_critic_kernel(x_ref, w_ref, out_ref, *,
                         d_pad, r_w1, r_b1, r_w2, r_b2, r_w3, r_b3):
    """x_ref: (block_b, d_pad); w_ref: packed (R, 128) slab; out_ref: (block_b, 128)."""
    x = x_ref[...]                                      # (block_b, d_pad)

    # shared = relu(x @ W1 + b1)        -> lanes [0, H), rest exactly 0
    w1 = w_ref[r_w1:r_w1 + d_pad, :]                    # (d_pad, 128)
    b1 = w_ref[r_b1:r_b1 + 1, :]                        # (1, 128)
    h = jnp.maximum(
        jnp.dot(x, w1, preferred_element_type=jnp.float32) + b1, 0.0)

    # fused first layer of both branches: hc[:, :H] actor, hc[:, H:2H] critic
    w2 = w_ref[r_w2:r_w2 + _LANES, :]                   # (128, 128)
    b2 = w_ref[r_b2:r_b2 + 1, :]
    hc = jnp.maximum(
        jnp.dot(h, w2, preferred_element_type=jnp.float32) + b2, 0.0)

    # fused heads (block-diagonal weight): out[:, :A] = mean, out[:, A] = value
    w3 = w_ref[r_w3:r_w3 + _LANES, :]                   # (128, 128)
    b3 = w_ref[r_b3:r_b3 + 1, :]
    out_ref[...] = (
        jnp.dot(hc, w3, preferred_element_type=jnp.float32) + b3
    ).astype(out_ref.dtype)


def pack_params(params):
    """Pack all weights/biases into one (R, 128) f32 slab.  Call once."""
    w1, b1 = params["w1"], params["b1"]
    wa1, ba1 = params["wa1"], params["ba1"]
    wa2, ba2 = params["wa2"], params["ba2"]
    wc1, bc1 = params["wc1"], params["bc1"]
    wc2, bc2 = params["wc2"], params["bc2"]

    D, H = w1.shape
    A = wa2.shape[1]
    assert 2 * H <= _LANES, "fused branch packing requires hidden_dim <= 64"
    assert A + 1 <= _LANES

    d_pad = _round_up(D, 8)
    r_w1 = 0
    r_b1 = r_w1 + d_pad
    r_w2 = r_b1 + 8
    r_b2 = r_w2 + _LANES
    r_w3 = r_b2 + 8
    r_b3 = r_w3 + _LANES
    n_rows = r_b3 + 8

    slab = jnp.zeros((n_rows, _LANES), jnp.float32)
    # layer 1
    slab = slab.at[r_w1:r_w1 + D, 0:H].set(w1)
    slab = slab.at[r_b1, 0:H].set(b1)
    # fused branch layer: [wa1 | wc1]
    slab = slab.at[r_w2:r_w2 + H, 0:H].set(wa1)
    slab = slab.at[r_w2:r_w2 + H, H:2 * H].set(wc1)
    slab = slab.at[r_b2, 0:H].set(ba1)
    slab = slab.at[r_b2, H:2 * H].set(bc1)
    # fused heads: block-diag [[wa2, 0], [0, wc2]]
    slab = slab.at[r_w3:r_w3 + H, 0:A].set(wa2)
    slab = slab.at[r_w3 + H:r_w3 + 2 * H, A:A + 1].set(wc2)
    slab = slab.at[r_b3, 0:A].set(ba2)
    slab = slab.at[r_b3, A:A + 1].set(bc2)

    offsets = dict(d_pad=d_pad, r_w1=r_w1, r_b1=r_b1, r_w2=r_w2,
                   r_b2=r_b2, r_w3=r_w3, r_b3=r_b3)
    return dict(slab=slab, log_std=params["log_std"], dims=(D, H, A),
                offsets=offsets)


def actor_critic_forward(x, packed):
    """x: (B, input_dim) f32.  Returns (mean (B,A), std (A,), value (B,1))."""
    D, H, A = packed["dims"]
    off = packed["offsets"]
    slab = packed["slab"]

    B = x.shape[0]
    d_pad = off["d_pad"]

    b_pad = _round_up(B, 8)
    if b_pad <= _MAX_BLOCK_B:
        block_b = b_pad
    else:
        block_b = _MAX_BLOCK_B
        b_pad = _round_up(B, _MAX_BLOCK_B)
    grid_b = b_pad // block_b

    x_pad = x
    if b_pad != B or d_pad != D:
        x_pad = jnp.pad(x, ((0, b_pad - B), (0, d_pad - D)))

    kernel = functools.partial(
        _actor_critic_kernel, d_pad=d_pad,
        r_w1=off["r_w1"], r_b1=off["r_b1"], r_w2=off["r_w2"],
        r_b2=off["r_b2"], r_w3=off["r_w3"], r_b3=off["r_b3"])

    out = pl.pallas_call(
        kernel,
        grid=(grid_b,),
        in_specs=[
            pl.BlockSpec((block_b, d_pad), lambda i: (i, 0)),   # x tile
            pl.BlockSpec(slab.shape, lambda i: (0, 0)),          # weight slab, resident
        ],
        out_specs=pl.BlockSpec((block_b, _LANES), lambda i: (i, 0)),
        out_shape=jax.ShapeDtypeStruct((b_pad, _LANES), jnp.float32),
        compiler_params=pltpu.CompilerParams(
            dimension_semantics=("parallel",)),
    )(x_pad, slab)

    mean = out[:B, :A]
    value = out[:B, A:A + 1]
    std = jnp.exp(packed["log_std"])   # x-independent; hoisted out of the kernel
    return mean, std, value


def init_params(key, input_dim, hidden_dim, action_dim):
    """Deterministic init mimicking PyTorch Linear default (U[-1/sqrt(fan_in), +])."""
    def linear(k, fan_in, fan_out):
        kw, kb = jax.random.split(k)
        bound = 1.0 / jnp.sqrt(jnp.float32(fan_in))
        w = jax.random.uniform(kw, (fan_in, fan_out), jnp.float32, -bound, bound)
        b = jax.random.uniform(kb, (fan_out,), jnp.float32, -bound, bound)
        return w, b

    ks = jax.random.split(key, 5)
    w1, b1 = linear(ks[0], input_dim, hidden_dim)
    wa1, ba1 = linear(ks[1], hidden_dim, hidden_dim)
    wa2, ba2 = linear(ks[2], hidden_dim, action_dim)
    wc1, bc1 = linear(ks[3], hidden_dim, hidden_dim)
    wc2, bc2 = linear(ks[4], hidden_dim, 1)
    log_std = jnp.zeros((action_dim,), jnp.float32)  # nn.Parameter(torch.zeros(A))
    return dict(w1=w1, b1=b1, wa1=wa1, ba1=ba1, wa2=wa2, ba2=ba2,
                wc1=wc1, bc1=bc1, wc2=wc2, bc2=bc2, log_std=log_std)


def _reference_forward(x, p):
    h = jnp.maximum(x @ p["w1"] + p["b1"], 0.0)
    a = jnp.maximum(h @ p["wa1"] + p["ba1"], 0.0)
    mean = a @ p["wa2"] + p["ba2"]
    c = jnp.maximum(h @ p["wc1"] + p["bc1"], 0.0)
    value = c @ p["wc2"] + p["bc2"]
    std = jnp.exp(p["log_std"])
    return mean, std, value


if __name__ == "__main__":
    # BipedalWalker-ish small shapes: obs dim 24, 4 actions, hidden 32, batch 8.
    B, input_dim, hidden_dim, action_dim = 8, 24, 32, 4

    key = jax.random.PRNGKey(0)
    kx, kp = jax.random.split(key)
    x = jax.random.normal(kx, (B, input_dim), jnp.float32)
    params = init_params(kp, input_dim, hidden_dim, action_dim)
    packed = pack_params(params)   # one-time weight packing (outside the kernel)

    mean, std, value = actor_critic_forward(x, packed)
    jax.block_until_ready((mean, std, value))

    # Sanity check against a pure-JAX reference.
    ref_mean, ref_std, ref_value = _reference_forward(x, params)
    assert mean.shape == (B, action_dim)
    assert std.shape == (action_dim,)
    assert value.shape == (B, 1)
    assert jnp.allclose(mean, ref_mean, atol=1e-5)
    assert jnp.allclose(std, ref_std, atol=1e-6)
    assert jnp.allclose(value, ref_value, atol=1e-5)

    print("KERNEL_OK")
</pallas_src>

<mosaic_0001>
module attributes {stable_mosaic.version = 11 : i64} {
  func.func @_actor_critic_kernel(%arg0: i32, %arg1: memref<8x24xf32, #tpu.memory_space<vmem>>, %arg2: memref<304x128xf32, #tpu.memory_space<vmem>>, %arg3: memref<8x128xf32, #tpu.memory_space<vmem>>) attributes {dimension_semantics = [#tpu.dimension_semantics<parallel>], iteration_bounds = array<i64: 1>, scalar_prefetch = 0 : i64, scratch_operands = 0 : i64, tpu.core_type = #tpu.core_type<tc>, window_params = [{transform_indices = @transform_0, window_bounds = array<i64: 8, 24>}, {pipeline_mode = #tpu.pipeline_mode<synchronous>, transform_indices = @transform_1, window_bounds = array<i64: 304, 128>}, {transform_indices = @transform_2, window_bounds = array<i64: 8, 128>}]} {
    %c0 = arith.constant 0 : index
    %c0_0 = arith.constant 0 : index
    %0 = vector.load %arg1[%c0, %c0_0] : memref<8x24xf32, #tpu.memory_space<vmem>>, vector<8x24xf32>
    %c0_1 = arith.constant 0 : index
    %c0_2 = arith.constant 0 : index
    %1 = vector.load %arg2[%c0_1, %c0_2] : memref<304x128xf32, #tpu.memory_space<vmem>>, vector<24x128xf32>
    %c24 = arith.constant 24 : index
    %c0_3 = arith.constant 0 : index
    %2 = vector.load %arg2[%c24, %c0_3] : memref<304x128xf32, #tpu.memory_space<vmem>>, vector<1x128xf32>
    %cst = arith.constant dense<0.000000e+00> : vector<8x128xf32>
    %3 = tpu.matmul %0, %1, %cst {dimension_numbers = #tpu.dot_dimension_numbers<[1], [0], [0], [1], [0, 0, 1, 1], [], []>} : vector<8x24xf32>, vector<24x128xf32>, vector<8x128xf32> -> vector<8x128xf32>
    %4 = vector.broadcast %2 : vector<1x128xf32> to vector<8x128xf32>
    %5 = arith.addf %3, %4 : vector<8x128xf32>
    %cst_4 = arith.constant 0.000000e+00 : f32
    %6 = vector.broadcast %cst_4 : f32 to vector<8x128xf32>
    %7 = arith.maximumf %5, %6 : vector<8x128xf32>
    %c32 = arith.constant 32 : index
    %c0_5 = arith.constant 0 : index
    %8 = vector.load %arg2[%c32, %c0_5] : memref<304x128xf32, #tpu.memory_space<vmem>>, vector<128x128xf32>
    %c160 = arith.constant 160 : index
    %c0_6 = arith.constant 0 : index
    %9 = vector.load %arg2[%c160, %c0_6] : memref<304x128xf32, #tpu.memory_space<vmem>>, vector<1x128xf32>
    %cst_7 = arith.constant dense<0.000000e+00> : vector<8x128xf32>
    %10 = tpu.matmul %7, %8, %cst_7 {dimension_numbers = #tpu.dot_dimension_numbers<[1], [0], [0], [1], [0, 0, 1, 1], [], []>} : vector<8x128xf32>, vector<128x128xf32>, vector<8x128xf32> -> vector<8x128xf32>
    %11 = vector.broadcast %9 : vector<1x128xf32> to vector<8x128xf32>
    %12 = arith.addf %10, %11 : vector<8x128xf32>
    %cst_8 = arith.constant 0.000000e+00 : f32
    %13 = vector.broadcast %cst_8 : f32 to vector<8x128xf32>
    %14 = arith.maximumf %12, %13 : vector<8x128xf32>
    %c168 = arith.constant 168 : index
    %c0_9 = arith.constant 0 : index
    %15 = vector.load %arg2[%c168, %c0_9] : memref<304x128xf32, #tpu.memory_space<vmem>>, vector<128x128xf32>
    %c296 = arith.constant 296 : index
    %c0_10 = arith.constant 0 : index
    %16 = vector.load %arg2[%c296, %c0_10] : memref<304x128xf32, #tpu.memory_space<vmem>>, vector<1x128xf32>
    %cst_11 = arith.constant dense<0.000000e+00> : vector<8x128xf32>
    %17 = tpu.matmul %14, %15, %cst_11 {dimension_numbers = #tpu.dot_dimension_numbers<[1], [0], [0], [1], [0, 0, 1, 1], [], []>} : vector<8x128xf32>, vector<128x128xf32>, vector<8x128xf32> -> vector<8x128xf32>
    %18 = vector.broadcast %16 : vector<1x128xf32> to vector<8x128xf32>
    %19 = arith.addf %17, %18 : vector<8x128xf32>
    %c0_12 = arith.constant 0 : index
    %c0_13 = arith.constant 0 : index
    %20 = vector.load %arg3[%c0_12, %c0_13] : memref<8x128xf32, #tpu.memory_space<vmem>>, vector<8x128xf32>
    tpu.vector_store %arg3[%c0_12, %c0_13], %19 {strides = array<i32>} : memref<8x128xf32, #tpu.memory_space<vmem>>, vector<8x128xf32>,
    return
  }
  func.func @transform_0(%arg0: i32) -> (i32, i32) {
    %c0_i32 = arith.constant 0 : i32
    %c0_i32_0 = arith.constant 0 : i32
    return %arg0, %c0_i32 : i32, i32
  }
  func.func @transform_1(%arg0: i32) -> (i32, i32) {
    %c0_i32 = arith.constant 0 : i32
    %c0_i32_0 = arith.constant 0 : i32
    %c0_i32_1 = arith.constant 0 : i32
    return %c0_i32, %c0_i32_0 : i32, i32
  }
  func.func @transform_2(%arg0: i32) -> (i32, i32) {
    %c0_i32 = arith.constant 0 : i32
    %c0_i32_0 = arith.constant 0 : i32
    return %arg0, %c0_i32 : i32, i32
  }
}

</mosaic_0001>

<llo_original>
// kernel: tpu_custom_call.1
$region0: #{tpu_custom_call.1}
  #allocation0 [shape = 'u32[]', space=smem, size = 0x4, offset = 0x4, fixed_abs, tag = 'smem constant byte address 0x4 - core index']
  #allocation1 [shape = 'u32[144,128]{1,0:T(1,128)}', space=vmem, size = 0x12000, scoped, tag = 'internal scratch']
  %s0 = inlined_call_operand.hbm [shape: f32[8,24], index: 0, kind: input, shape index: {}]
  %s1 = inlined_call_operand.hbm [shape: f32[304,128], index: 1, kind: input, shape index: {}]
  %s2 = inlined_call_operand.hbm [shape: f32[8,128], index: 2, kind: output, shape index: {}]
  %s3 = sld [smem:[#allocation0]]
  $region26: #{tpu_custom_call.1} parent=0
    _
  %s5 = ssub.s32 1, %s3
  %s6 = scalar_select 0, %s5, %s3
  $region1: #{tpu_custom_call.1} parent=0
    #allocation2 [shape = 'u8[4096]{0}', space=vmem, size = 0x1000, scoped, tag = 'input window, operand 0, single buffered']
    #allocation3 [shape = 's32[1]{0}', space=sflag, size = 0x4, scoped, tag = 'scoped memory for tpu_custom_call.1']
    #allocation4 [shape = 's32[1]{0}', space=sflag, size = 0x4, scoped, tag = 'scoped memory for tpu_custom_call.1']
    #allocation5 [shape = 'u8[155648]{0}', space=vmem, size = 0x26000, scoped, tag = 'input window, operand 1, single buffered']
    #allocation6 [shape = 's32[1]{0}', space=sflag, size = 0x4, scoped, tag = 'scoped memory for tpu_custom_call.1']
    #allocation7 [shape = 'u8[4096]{0}', space=vmem, size = 0x1000, scoped, tag = 'output window, operand 0, single buffered']
    %7 = vsyncpa [#allocation3], 0
    %8 = vsyncpa [#allocation6], 0
    %9 = vsyncpa [#allocation4], 0
    // Predicated region
    $region2: #{tpu_custom_call.1} parent=1 // pred_check
      _
    $region3: #{tpu_custom_call.1} parent=1 // pred_check_branch
      %11 = sbr.rel (0) target = $region5
    $region4: #{tpu_custom_call.1} parent=1 // pred_region
      %s13 = ssub.s32 128, 128
      %14 = vsyncadd [#allocation3], %s13
      %s16 = sshll.u32 [#allocation2], 4
      %s17 = int_to_ptr.vmem [resolvable:$true] %s16
      %19 = dma.hbm_to_vmem [thread:$0]  %s0, 128, %s17, [#allocation3]
    $region5: #{tpu_custom_call.1} parent=1 // pred_fallthru
      _
    // Predicated region
    $region6: #{tpu_custom_call.1} parent=1 // pred_check
      _
    $region7: #{tpu_custom_call.1} parent=1 // pred_check_branch
      %21 = sbr.rel (0) target = $region9
    $region8: #{tpu_custom_call.1} parent=1 // pred_region
      %s23 = ssub.s32 4864, 4864
      %24 = vsyncadd [#allocation6], %s23
      %s25 = sshll.u32 [#allocation5], 4
      %s26 = int_to_ptr.vmem [resolvable:$true] %s25
      %31 = dma.hbm_to_vmem [thread:$0]  %s1, 4864, %s26, [#allocation6], 128, 128, 8
    $region9: #{tpu_custom_call.1} parent=1 // pred_fallthru
      _
    // Predicated region
    $region10: #{tpu_custom_call.1} parent=1 // pred_check
      _
    $region11: #{tpu_custom_call.1} parent=1 // pred_check_branch
      %33 = sbr.rel (0) target = $region13
    $region12: #{tpu_custom_call.1} parent=1 // pred_region
      %34 = dma.done [#allocation3], 128
    $region13: #{tpu_custom_call.1} parent=1 // pred_fallthru
      _
    // Predicated region
    $region14: #{tpu_custom_call.1} parent=1 // pred_check
      _
    $region15: #{tpu_custom_call.1} parent=1 // pred_check_branch
      %36 = sbr.rel (0) target = $region17
    $region16: #{tpu_custom_call.1} parent=1 // pred_region
      %37 = dma.done [#allocation6], 4864
    $region17: #{tpu_custom_call.1} parent=1 // pred_fallthru
      _
    %v38 = vld [vmem:[#allocation2] sm:$0xff]
    %v39 = vld [vmem:[#allocation5] sm:$0xff]
    %v40 = vld [vmem:[#allocation5 + $0x8] sm:$0xff]
    %v41 = vld [vmem:[#allocation5 + $0x10] sm:$0xff]
    %v42 = vld [vmem:[#allocation5 + $0x18] sm:$0x1]
    %v43 = vlaneseq
    %v44 = vshrl.u32 %v43, 7
    %v45 = vsub.s32 0, %v44
    %v46 = vrot.slane %v42, %v45
    %vm47 = vcmask 195584
    %v49 = vsel %vm47, %v38, 0
    %51 = vmatprep.subr.mxu0 0.0
    %52 = vmatpush1.msra.mxu0 0.0
    %53 = vmatprep.subr.mxu0 0.0
    %54 = vmatpush1.msra.mxu0 0.0
    %55 = vmatprep.subr.mxu0 0.0
    %56 = vmatpush1.msra.mxu0 0.0
    %57 = vmatprep.subr.mxu0 0.0
    %58 = vmatpush1.msra.mxu0 0.0
    %59 = vmatprep.subr.mxu0 0.0
    %60 = vmatpush1.msra.mxu0 0.0
    %61 = vmatprep.subr.mxu0 0.0
    %62 = vmatpush1.msra.mxu0 0.0
    %63 = vmatprep.subr.mxu0 0.0
    %64 = vmatpush1.msra.mxu0 0.0
    %65 = vmatprep.subr.mxu0 0.0
    %66 = vmatpush1.msra.mxu0 0.0
    %67 = vmatprep.subr.mxu0 0.0
    %68 = vmatpush1.msra.mxu0 0.0
    %69 = vmatprep.subr.mxu0 0.0
    %70 = vmatpush1.msra.mxu0 0.0
    %71 = vmatprep.subr.mxu0 0.0
    %72 = vmatpush1.msra.mxu0 0.0
    %73 = vmatprep.subr.mxu0 0.0
    %74 = vmatpush1.msra.mxu0 0.0
    %75 = vmatprep.subr.mxu0 0.0
    %76 = vmatpush1.msra.mxu0 0.0
    %77 = vmatprep.subr.mxu0 0.0
    %78 = vmatpush1.msra.mxu0 %v41
    %79 = vmatprep.subr.mxu0 0.0
    %80 = vmatpush1.msra.mxu0 %v40
    %81 = vmatprep.subr.mxu0 0.0
    %82 = vmatpush1.msra.mxu0 %v39
    %83 = vmatprep.subr.mxu0 0.0
    %84 = vmatpush2.msra.mxu0 0.0
    %85 = vmatprep.subr.mxu0 0.0
    %86 = vmatpush2.msra.mxu0 0.0
    %87 = vmatprep.subr.mxu0 0.0
    %88 = vmatpush2.msra.mxu0 0.0
    %89 = vmatprep.subr.mxu0 0.0
    %90 = vmatpush2.msra.mxu0 0.0
    %91 = vmatprep.subr.mxu0 0.0
    %92 = vmatpush2.msra.mxu0 0.0
    %93 = vmatprep.subr.mxu0 0.0
    %94 = vmatpush2.msra.mxu0 0.0
    %95 = vmatprep.subr.mxu0 0.0
    %96 = vmatpush2.msra.mxu0 0.0
    %97 = vmatprep.subr.mxu0 0.0
    %98 = vmatpush2.msra.mxu0 0.0
    %99 = vmatprep.subr.mxu0 0.0
    %100 = vmatpush2.msra.mxu0 0.0
    %101 = vmatprep.subr.mxu0 0.0
    %102 = vmatpush2.msra.mxu0 0.0
    %103 = vmatprep.subr.mxu0 0.0
    %104 = vmatpush2.msra.mxu0 0.0
    %105 = vmatprep.subr.mxu0 0.0
    %106 = vmatpush2.msra.mxu0 0.0
    %107 = vmatprep.subr.mxu0 0.0
    %108 = vmatpush2.msra.mxu0 0.0
    %109 = vmatprep.subr.mxu0 0.0
    %110 = vmatpush2.msra.mxu0 0.0
    %111 = vmatprep.subr.mxu0 0.0
    %112 = vmatpush2.msra.mxu0 0.0
    %113 = vmatprep.subr.mxu0 0.0
    %114 = vmatpush2.msra.mxu0 0.0
    %115 = vmatprep.mubr.f32.mxu0 0.0
    %116 = vmatmul.mubr.f32.gmra.mxu0 %v49
    %v117 = vpop.f32.mrf.mxu0
    %v118 = vadd.f32 %v46, %v117
    %v119 = vpop.f32.mrf.mxu0
    %120 = vdwg.mxu0
    %v121 = vmax.f32 %v118, 0.0
    %v122 = vld [vmem:[#allocation5 + $0x20] sm:$0xff]
    %v123 = vld [vmem:[#allocation5 + $0x28] sm:$0xff]
    %v124 = vld [vmem:[#allocation5 + $0x30] sm:$0xff]
    %v125 = vld [vmem:[#allocation5 + $0x38] sm:$0xff]
    %v126 = vld [vmem:[#allocation5 + $0x40] sm:$0xff]
    %v127 = vld [vmem:[#allocation5 + $0x48] sm:$0xff]
    %v128 = vld [vmem:[#allocation5 + $0x50] sm:$0xff]
    %v129 = vld [vmem:[#allocation5 + $0x58] sm:$0xff]
    %v130 = vld [vmem:[#allocation5 + $0x60] sm:$0xff]
    %v131 = vld [vmem:[#allocation5 + $0x68] sm:$0xff]
    %v132 = vld [vmem:[#allocation5 + $0x70] sm:$0xff]
    %v133 = vld [vmem:[#allocation5 + $0x78] sm:$0xff]
    %v134 = vld [vmem:[#allocation5 + $0x80] sm:$0xff]
    %v135 = vld [vmem:[#allocation5 + $0x88] sm:$0xff]
    %v136 = vld [vmem:[#allocation5 + $0x90] sm:$0xff]
    %v137 = vld [vmem:[#allocation5 + $0x98] sm:$0xff]
    %v138 = vld [vmem:[#allocation5 + $0xa0] sm:$0x1]
    %v139 = vlaneseq
    %v140 = vshrl.u32 %v139, 7
    %v141 = vsub.s32 0, %v140
    %v142 = vrot.slane %v138, %v141
    %143 = vmatprep.subr.mxu0 0.0
    %144 = vmatpush1.msra.mxu0 %v137
    %145 = vmatprep.subr.mxu0 0.0
    %146 = vmatpush1.msra.mxu0 %v136
    %147 = vmatprep.subr.mxu0 0.0
    %148 = vmatpush1.msra.mxu0 %v135
    %149 = vmatprep.subr.mxu0 0.0
    %150 = vmatpush1.msra.mxu0 %v134
    %151 = vmatprep.subr.mxu0 0.0
    %152 = vmatpush1.msra.mxu0 %v133
    %153 = vmatprep.subr.mxu0 0.0
    %154 = vmatpush1.msra.mxu0 %v132
    %155 = vmatprep.subr.mxu0 0.0
    %156 = vmatpush1.msra.mxu0 %v131
    %157 = vmatprep.subr.mxu0 0.0
    %158 = vmatpush1.msra.mxu0 %v130
    %159 = vmatprep.subr.mxu0 0.0
    %160 = vmatpush1.msra.mxu0 %v129
    %161 = vmatprep.subr.mxu0 0.0
    %162 = vmatpush1.msra.mxu0 %v128
    %163 = vmatprep.subr.mxu0 0.0
    %164 = vmatpush1.msra.mxu0 %v127
    %165 = vmatprep.subr.mxu0 0.0
    %166 = vmatpush1.msra.mxu0 %v126
    %167 = vmatprep.subr.mxu0 0.0
    %168 = vmatpush1.msra.mxu0 %v125
    %169 = vmatprep.subr.mxu0 0.0
    %170 = vmatpush1.msra.mxu0 %v124
    %171 = vmatprep.subr.mxu0 0.0
    %172 = vmatpush1.msra.mxu0 %v123
    %173 = vmatprep.subr.mxu0 0.0
    %174 = vmatpush1.msra.mxu0 %v122
    %175 = vmatprep.subr.mxu0 0.0
    %176 = vmatpush2.msra.mxu0 0.0
    %177 = vmatprep.subr.mxu0 0.0
    %178 = vmatpush2.msra.mxu0 0.0
    %179 = vmatprep.subr.mxu0 0.0
    %180 = vmatpush2.msra.mxu0 0.0
    %181 = vmatprep.subr.mxu0 0.0
    %182 = vmatpush2.msra.mxu0 0.0
    %183 = vmatprep.subr.mxu0 0.0
    %184 = vmatpush2.msra.mxu0 0.0
    %185 = vmatprep.subr.mxu0 0.0
    %186 = vmatpush2.msra.mxu0 0.0
    %187 = vmatprep.subr.mxu0 0.0
    %188 = vmatpush2.msra.mxu0 0.0
    %189 = vmatprep.subr.mxu0 0.0
    %190 = vmatpush2.msra.mxu0 0.0
    %191 = vmatprep.subr.mxu0 0.0
    %192 = vmatpush2.msra.mxu0 0.0
    %193 = vmatprep.subr.mxu0 0.0
    %194 = vmatpush2.msra.mxu0 0.0
    %195 = vmatprep.subr.mxu0 0.0
    %196 = vmatpush2.msra.mxu0 0.0
    %197 = vmatprep.subr.mxu0 0.0
    %198 = vmatpush2.msra.mxu0 0.0
    %199 = vmatprep.subr.mxu0 0.0
    %200 = vmatpush2.msra.mxu0 0.0
    %201 = vmatprep.subr.mxu0 0.0
    %202 = vmatpush2.msra.mxu0 0.0
    %203 = vmatprep.subr.mxu0 0.0
    %204 = vmatpush2.msra.mxu0 0.0
    %205 = vmatprep.subr.mxu0 0.0
    %206 = vmatpush2.msra.mxu0 0.0
    %207 = vmatprep.mubr.f32.mxu0 0.0
    %208 = vmatmul.mubr.f32.gmra.mxu0 %v121
    %v209 = vpop.f32.mrf.mxu0
    %v210 = vadd.f32 %v142, %v209
    %v211 = vpop.f32.mrf.mxu0
    %212 = vdwg.mxu0
    %v213 = vmax.f32 %v210, 0.0
    %v214 = vld [vmem:[#allocation5 + $0xa8] sm:$0xff]
    %v215 = vld [vmem:[#allocation5 + $0xb0] sm:$0xff]
    %v216 = vld [vmem:[#allocation5 + $0xb8] sm:$0xff]
    %v217 = vld [vmem:[#allocation5 + $0xc0] sm:$0xff]
    %v218 = vld [vmem:[#allocation5 + $0xc8] sm:$0xff]
    %v219 = vld [vmem:[#allocation5 + $0xd0] sm:$0xff]
    %v220 = vld [vmem:[#allocation5 + $0xd8] sm:$0xff]
    %v221 = vld [vmem:[#allocation5 + $0xe0] sm:$0xff]
    %v222 = vld [vmem:[#allocation5 + $0xe8] sm:$0xff]
    %v223 = vld [vmem:[#allocation5 + $0xf0] sm:$0xff]
    %v224 = vld [vmem:[#allocation5 + $0xf8] sm:$0xff]
    %v225 = vld [vmem:[#allocation5 + $0x100] sm:$0xff]
    %v226 = vld [vmem:[#allocation5 + $0x108] sm:$0xff]
    %v227 = vld [vmem:[#allocation5 + $0x110] sm:$0xff]
    %v228 = vld [vmem:[#allocation5 + $0x118] sm:$0xff]
    %v229 = vld [vmem:[#allocation5 + $0x120] sm:$0xff]
    %v230 = vld [vmem:[#allocation5 + $0x128] sm:$0x1]
    %v231 = vlaneseq
    %v232 = vshrl.u32 %v231, 7
    %v233 = vsub.s32 0, %v232
    %v234 = vrot.slane %v230, %v233
    %235 = vmatprep.subr.mxu0 0.0
    %236 = vmatpush1.msra.mxu0 %v229
    %237 = vmatprep.subr.mxu0 0.0
    %238 = vmatpush1.msra.mxu0 %v228
    %239 = vmatprep.subr.mxu0 0.0
    %240 = vmatpush1.msra.mxu0 %v227
    %241 = vmatprep.subr.mxu0 0.0
    %242 = vmatpush1.msra.mxu0 %v226
    %243 = vmatprep.subr.mxu0 0.0
    %244 = vmatpush1.msra.mxu0 %v225
    %245 = vmatprep.subr.mxu0 0.0
    %246 = vmatpush1.msra.mxu0 %v224
    %247 = vmatprep.subr.mxu0 0.0
    %248 = vmatpush1.msra.mxu0 %v223
    %249 = vmatprep.subr.mxu0 0.0
    %250 = vmatpush1.msra.mxu0 %v222
    %251 = vmatprep.subr.mxu0 0.0
    %252 = vmatpush1.msra.mxu0 %v221
    %253 = vmatprep.subr.mxu0 0.0
    %254 = vmatpush1.msra.mxu0 %v220
    %255 = vmatprep.subr.mxu0 0.0
    %256 = vmatpush1.msra.mxu0 %v219
    %257 = vmatprep.subr.mxu0 0.0
    %258 = vmatpush1.msra.mxu0 %v218
    %259 = vmatprep.subr.mxu0 0.0
    %260 = vmatpush1.msra.mxu0 %v217
    %261 = vmatprep.subr.mxu0 0.0
    %262 = vmatpush1.msra.mxu0 %v216
    %263 = vmatprep.subr.mxu0 0.0
    %264 = vmatpush1.msra.mxu0 %v215
    %265 = vmatprep.subr.mxu0 0.0
    %266 = vmatpush1.msra.mxu0 %v214
    %267 = vmatprep.subr.mxu0 0.0
    %268 = vmatpush2.msra.mxu0 0.0
    %269 = vmatprep.subr.mxu0 0.0
    %270 = vmatpush2.msra.mxu0 0.0
    %271 = vmatprep.subr.mxu0 0.0
    %272 = vmatpush2.msra.mxu0 0.0
    %273 = vmatprep.subr.mxu0 0.0
    %274 = vmatpush2.msra.mxu0 0.0
    %275 = vmatprep.subr.mxu0 0.0
    %276 = vmatpush2.msra.mxu0 0.0
    %277 = vmatprep.subr.mxu0 0.0
    %278 = vmatpush2.msra.mxu0 0.0
    %279 = vmatprep.subr.mxu0 0.0
    %280 = vmatpush2.msra.mxu0 0.0
    %281 = vmatprep.subr.mxu0 0.0
    %282 = vmatpush2.msra.mxu0 0.0
    %283 = vmatprep.subr.mxu0 0.0
    %284 = vmatpush2.msra.mxu0 0.0
    %285 = vmatprep.subr.mxu0 0.0
    %286 = vmatpush2.msra.mxu0 0.0
    %287 = vmatprep.subr.mxu0 0.0
    %288 = vmatpush2.msra.mxu0 0.0
    %289 = vmatprep.subr.mxu0 0.0
    %290 = vmatpush2.msra.mxu0 0.0
    %291 = vmatprep.subr.mxu0 0.0
    %292 = vmatpush2.msra.mxu0 0.0
    %293 = vmatprep.subr.mxu0 0.0
    %294 = vmatpush2.msra.mxu0 0.0
    %295 = vmatprep.subr.mxu0 0.0
    %296 = vmatpush2.msra.mxu0 0.0
    %297 = vmatprep.subr.mxu0 0.0
    %298 = vmatpush2.msra.mxu0 0.0
    %299 = vmatprep.mubr.f32.mxu0 0.0
    %300 = vmatmul.mubr.f32.gmra.mxu0 %v213
    %v301 = vpop.f32.mrf.mxu0
    %v302 = vadd.f32 %v234, %v301
    %v303 = vpop.f32.mrf.mxu0
    %304 = vdwg.mxu0
    %305 = vst [vmem:[#allocation7] sm:$0xff] %v302
    // Predicated region
    $region18: #{tpu_custom_call.1} parent=1 // pred_check
      _
    $region19: #{tpu_custom_call.1} parent=1 // pred_check_branch
      %307 = sbr.rel (0) target = $region21
    $region20: #{tpu_custom_call.1} parent=1 // pred_region
      %s309 = ssub.s32 128, 128
      %310 = vsyncadd [#allocation4], %s309
      %s312 = sshll.u32 [#allocation7], 4
      %s313 = int_to_ptr.vmem [resolvable:$true] %s312
      %315 = dma.vmem_to_hbm [thread:$0]  %s313, 128, %s2, [#allocation4]
    $region21: #{tpu_custom_call.1} parent=1 // pred_fallthru
      _
    // Predicated region
    $region22: #{tpu_custom_call.1} parent=1 // pred_check
      _
    $region23: #{tpu_custom_call.1} parent=1 // pred_check_branch
      %317 = sbr.rel (0) target = $region25
    $region24: #{tpu_custom_call.1} parent=1 // pred_region
      %318 = dma.done [#allocation4], 128
    $region25: #{tpu_custom_call.1} parent=1 // pred_fallthru
      _
    %319 = vsyncpa [#allocation3], 1
    %320 = vsyncpa [#allocation6], 1
    %321 = vsyncpa [#allocation4], 1

</llo_original>
